<compile_context>
chip_gen: v7x
topology: tpu7x:2x2x1
jax: 0.10.0
libtpu: 0.0.40
codegen_flags: <defaults>
</compile_context>

<pallas_src>
import functools

import jax
import jax.numpy as jnp
from jax.experimental import pallas as pl
from jax.experimental.pallas import tpu as pltpu


# ------------------------------ small helpers ---------------------------------

def _vmem_limit_bytes():
    """Scoped-VMEM limit to request: ~3/4 of physical, capped at 64 MiB."""
    cap = 64 * 1024 * 1024  # conservative fallback (v7x per-TC VMEM)
    try:
        info = pltpu.get_tpu_info()
        cap = int(getattr(info, "vmem_capacity_bytes", cap) or cap)
    except Exception:
        pass
    return min((cap * 3) // 4, 64 * 1024 * 1024)


def _largest_aligned_divisor(n, cap, align):
    """Largest t <= cap with t % align == 0 and n % t == 0, else None."""
    cap = min(n, max(align, int(cap)))
    best = None
    for t in range(align, cap + 1, align):
        if n % t == 0:
            best = t
    return best


# --------------------------- single-pass kernel -------------------------------

def _adain_rows_kernel(x_ref, w_ref, b_ref, o_ref, *, eps, inv_hw, native_epilogue):
    # x_ref/o_ref: (tile_bc, HW) tiles.  w_ref/b_ref: (tile_bc, 1) per-step
    # mini blocks delivered by the pipeline (no in-kernel dynamic slicing).
    xf = x_ref[...].astype(jnp.float32)
    # sum / sum-of-squares: no full-tile "centered" temporary.
    s1 = jnp.sum(xf, axis=-1, keepdims=True)
    s2 = jnp.sum(xf * xf, axis=-1, keepdims=True)
    mean = s1 * inv_hw
    # E[x^2] - mean^2 can dip slightly negative in finite precision: clamp.
    var = jnp.maximum(s2 * inv_hw - mean * mean, 0.0)
    inv = jax.lax.rsqrt(var + eps)
    # Fold the affine into per-row scale/shift: 1 mul + 1 add per element.
    scale = inv * w_ref[...].astype(jnp.float32)
    shift = b_ref[...].astype(jnp.float32) - mean * scale
    if native_epilogue:
        x = x_ref[...]
        o_ref[...] = (x * scale.astype(x.dtype) + shift.astype(x.dtype)).astype(o_ref.dtype)
    else:
        o_ref[...] = (xf * scale + shift).astype(o_ref.dtype)


# ----------------------- two-pass (stats + apply) path ------------------------

def _adain_stats_kernel(x_ref, w_ref, b_ref, scale_ref, shift_ref, *, eps, inv_hw):
    # Accumulate per-row sum / sum-of-squares over HW tiles; on the last spatial
    # step finalize directly to the folded affine (scale = rsqrt(var+eps)*w,
    # shift = b - mean*scale) so the apply pass is a pure streamed FMA.
    # scale_ref/shift_ref are (tile_bc, 1) f32 output blocks resident across the
    # 'arbitrary' HW axis (constant output block index along k).
    k = pl.program_id(1)

    @pl.when(k == 0)
    def _init():
        scale_ref[...] = jnp.zeros_like(scale_ref)
        shift_ref[...] = jnp.zeros_like(shift_ref)

    xf = x_ref[...].astype(jnp.float32)
    scale_ref[...] += jnp.sum(xf, axis=-1, keepdims=True)        # running sum
    shift_ref[...] += jnp.sum(xf * xf, axis=-1, keepdims=True)   # running sum of squares

    @pl.when(k == pl.num_programs(1) - 1)
    def _finalize():
        mean = scale_ref[...] * inv_hw
        var = jnp.maximum(shift_ref[...] * inv_hw - mean * mean, 0.0)
        scale = jax.lax.rsqrt(var + eps) * w_ref[...].astype(jnp.float32)
        scale_ref[...] = scale
        shift_ref[...] = b_ref[...].astype(jnp.float32) - mean * scale


def _adain_apply_kernel(x_ref, scale_ref, shift_ref, o_ref, *, native_epilogue):
    # x_ref/o_ref: (tile_bc, tile_hw); scale_ref/shift_ref: (tile_bc, 1) per-i
    # mini blocks.  Pure streamed FMA — DMA bound.
    if native_epilogue:
        x = x_ref[...]
        o_ref[...] = (x * scale_ref[...].astype(x.dtype)
                      + shift_ref[...].astype(x.dtype)).astype(o_ref.dtype)
    else:
        o_ref[...] = (x_ref[...].astype(jnp.float32) * scale_ref[...]
                      + shift_ref[...]).astype(o_ref.dtype)


# --------------------------------- wrapper ------------------------------------

def adaptive_instance_norm_2d(x, weight, bias, *, eps=1e-5, momentum=0.1,
                              tile_bc=None, tile_hw=None,
                              tile_budget_bytes=None, native_epilogue=None):
    """AdaIN forward.  x: (B, C, H, W); weight, bias: (B*C,).  Returns (B, C, H, W).

    `momentum` only affects the running-stat buffers (a side effect in the
    PyTorch module) and never the forward output: accepted for parity, ignored.
    """
    del momentum
    B, C, H, W = x.shape
    BC, HW = B * C, H * W
    assert weight.shape == (BC,) and bias.shape == (BC,)

    itemsize = jnp.dtype(x.dtype).itemsize
    sublane = max(8, 32 // itemsize)               # 8 for f32, 16 for bf16
    if native_epilogue is None:
        native_epilogue = (x.dtype == jnp.bfloat16)

    vmem_limit = _vmem_limit_bytes()               # 48 MiB on v7x, 64 MiB on v5e/v6e
    if tile_budget_bytes is None:
        # Per-step footprint ~ 2x(in) + 2x(out) native-dtype tiles plus ~2 f32
        # working copies -> bound the native tile to ~1/12 of the scoped limit.
        tile_budget_bytes = max(512 * 1024, vmem_limit // 12)

    x2d = x.reshape(BC, HW)                        # HBM stream stays in native dtype
    w2d = weight.reshape(BC, 1)
    b2d = bias.reshape(BC, 1)

    # Single-pass vs two-pass: based on the real per-step VMEM footprint of the
    # smallest legal single-pass tile, not a fixed element count.  Two-pass is
    # 1.5x HBM traffic, so stay single-pass whenever it fits.
    if tile_hw is not None:
        two_pass = tile_hw < HW
    else:
        min_tile_bytes = min(BC, sublane) * HW * itemsize
        two_pass = 12 * min_tile_bytes > vmem_limit

    if not two_pass:
        # ---------------- single pass: each grid step owns whole rows --------
        if tile_bc is None:
            row_bytes = HW * itemsize
            cap_rows = max(sublane,
                           (tile_budget_bytes // max(1, row_bytes)) // sublane * sublane)
            if BC <= sublane:
                tile_bc = BC                       # full axis: always layout-legal
            elif BC <= cap_rows:
                # Whole axis would fit one tile: split ~in half (sublane-aligned)
                # so the 'parallel' axis has >=2 steps (megacore / 2 TCs on v7x).
                tile_bc = max(sublane, (BC // 2) // sublane * sublane)
            else:
                tile_bc = cap_rows
        grid = (pl.cdiv(BC, tile_bc),)             # partial tail block is fine

        out2d = pl.pallas_call(
            functools.partial(_adain_rows_kernel, eps=eps, inv_hw=1.0 / HW,
                              native_epilogue=native_epilogue),
            out_shape=jax.ShapeDtypeStruct((BC, HW), x.dtype),
            grid_spec=pltpu.PrefetchScalarGridSpec(
                num_scalar_prefetch=0,
                grid=grid,
                in_specs=[
                    pl.BlockSpec((tile_bc, HW), lambda i: (i, 0)),
                    pl.BlockSpec((tile_bc, 1), lambda i: (i, 0)),
                    pl.BlockSpec((tile_bc, 1), lambda i: (i, 0)),
                ],
                out_specs=pl.BlockSpec((tile_bc, HW), lambda i: (i, 0)),
            ),
            compiler_params=pltpu.CompilerParams(
                dimension_semantics=("parallel",),
                vmem_limit_bytes=vmem_limit),
            cost_estimate=pl.CostEstimate(
                flops=6 * BC * HW, transcendentals=BC,
                bytes_accessed=2 * BC * HW * itemsize),
        )(x2d, w2d, b2d)
        return out2d.reshape(B, C, H, W)

    # -------- two-pass fallback: rows too long for VMEM -> tile HW as well ---
    if tile_bc is None:
        tile_bc = BC if BC <= sublane else min(8 * sublane, (BC // sublane) * sublane)
    if tile_hw is None:
        cap_hw = max(128, tile_budget_bytes // max(1, tile_bc * itemsize))
        tile_hw = _largest_aligned_divisor(HW, cap_hw, 128)
        if tile_hw is None:
            # No 128-aligned divisor of HW fits the budget: fall back to full
            # rows (best effort; may exceed the budget for pathological HW).
            tile_hw = HW
    assert HW % tile_hw == 0, "two-pass path requires tile_hw to divide H*W"
    grid = (pl.cdiv(BC, tile_bc), HW // tile_hw)

    scale, shift = pl.pallas_call(
        functools.partial(_adain_stats_kernel, eps=eps, inv_hw=1.0 / HW),
        out_shape=(jax.ShapeDtypeStruct((BC, 1), jnp.float32),
                   jax.ShapeDtypeStruct((BC, 1), jnp.float32)),
        grid_spec=pltpu.PrefetchScalarGridSpec(
            num_scalar_prefetch=0,
            grid=grid,
            in_specs=[
                pl.BlockSpec((tile_bc, tile_hw), lambda i, k: (i, k)),
                pl.BlockSpec((tile_bc, 1), lambda i, k: (i, 0)),
                pl.BlockSpec((tile_bc, 1), lambda i, k: (i, 0)),
            ],
            out_specs=(pl.BlockSpec((tile_bc, 1), lambda i, k: (i, 0)),
                       pl.BlockSpec((tile_bc, 1), lambda i, k: (i, 0))),
        ),
        compiler_params=pltpu.CompilerParams(
            dimension_semantics=("parallel", "arbitrary"),
            vmem_limit_bytes=vmem_limit),
        cost_estimate=pl.CostEstimate(
            flops=3 * BC * HW, transcendentals=BC,
            bytes_accessed=BC * HW * itemsize),
    )(x2d, w2d, b2d)

    out2d = pl.pallas_call(
        functools.partial(_adain_apply_kernel, native_epilogue=native_epilogue),
        out_shape=jax.ShapeDtypeStruct((BC, HW), x.dtype),
        grid_spec=pltpu.PrefetchScalarGridSpec(
            num_scalar_prefetch=0,
            grid=grid,
            in_specs=[
                pl.BlockSpec((tile_bc, tile_hw), lambda i, k: (i, k)),
                pl.BlockSpec((tile_bc, 1), lambda i, k: (i, 0)),
                pl.BlockSpec((tile_bc, 1), lambda i, k: (i, 0)),
            ],
            out_specs=pl.BlockSpec((tile_bc, tile_hw), lambda i, k: (i, k)),
        ),
        compiler_params=pltpu.CompilerParams(
            dimension_semantics=("parallel", "parallel"),
            vmem_limit_bytes=vmem_limit),
        cost_estimate=pl.CostEstimate(
            flops=2 * BC * HW, transcendentals=0,
            bytes_accessed=2 * BC * HW * itemsize),
    )(x2d, scale, shift)
    return out2d.reshape(B, C, H, W)


# -------------------------------- reference -----------------------------------

def _reference_adain(x, weight, bias, eps=1e-5):
    B, C, H, W = x.shape
    xr = x.reshape(B * C, H * W).astype(jnp.float32)
    mean = jnp.mean(xr, axis=-1, keepdims=True)
    var = jnp.mean((xr - mean) ** 2, axis=-1, keepdims=True)
    y = (xr - mean) / jnp.sqrt(var + eps) * weight[:, None].astype(jnp.float32) \
        + bias[:, None].astype(jnp.float32)
    return y.reshape(B, C, H, W).astype(x.dtype)


if __name__ == "__main__":
    key = jax.random.PRNGKey(0)
    kx, kw, kb, kx2, kw2, kb2 = jax.random.split(key, 6)

    # --- small shape consistent with the module (single-pass path) -----------
    B, C, H, W = 2, 4, 16, 16
    x = jax.random.normal(kx, (B, C, H, W), dtype=jnp.float32)
    # AdaIN weight/bias are assigned externally (e.g. from a style MLP); shape
    # is (B * num_features,) because of the (1, B*C, H, W) batch_norm view.
    weight = jax.random.normal(kw, (B * C,), dtype=jnp.float32) + 1.0
    bias = jax.random.normal(kb, (B * C,), dtype=jnp.float32) * 0.1

    out = adaptive_instance_norm_2d(x, weight, bias, eps=1e-5, momentum=0.1)
    out = jax.block_until_ready(out)
    ref = _reference_adain(x, weight, bias, eps=1e-5)
    assert out.shape == (B, C, H, W)
    assert jnp.allclose(out, ref, atol=1e-4, rtol=1e-4), "single-pass mismatch"

    # --- exercise the HW-tiled two-pass (stats + apply) fallback --------------
    B2, C2, H2, W2 = 2, 8, 32, 32
    x2 = jax.random.normal(kx2, (B2, C2, H2, W2), dtype=jnp.float32)
    weight2 = jax.random.normal(kw2, (B2 * C2,), dtype=jnp.float32) + 1.0
    bias2 = jax.random.normal(kb2, (B2 * C2,), dtype=jnp.float32) * 0.1

    out2 = adaptive_instance_norm_2d(x2, weight2, bias2, eps=1e-5,
                                     tile_bc=8, tile_hw=256)
    out2 = jax.block_until_ready(out2)
    ref2 = _reference_adain(x2, weight2, bias2, eps=1e-5)
    assert jnp.allclose(out2, ref2, atol=1e-4, rtol=1e-4), "two-pass mismatch"

    # TODO(synk): running_mean/running_var (momentum) buffer updates are a
    # training-time side effect in the PyTorch module and are not reproduced.
    print("KERNEL_OK")
</pallas_src>

<mosaic_0001>
module attributes {stable_mosaic.version = 11 : i64} {
  func.func @_adain_rows_kernel(%arg0: i32, %arg1: memref<8x256xf32, #tpu.memory_space<vmem>>, %arg2: memref<8x1xf32, #tpu.memory_space<vmem>>, %arg3: memref<8x1xf32, #tpu.memory_space<vmem>>, %arg4: memref<8x256xf32, #tpu.memory_space<vmem>>) attributes {dimension_semantics = [#tpu.dimension_semantics<parallel>], iteration_bounds = array<i64: 1>, scalar_prefetch = 0 : i64, scratch_operands = 0 : i64, tpu.core_type = #tpu.core_type<tc>, window_params = [{transform_indices = @transform_0, window_bounds = array<i64: 8, 256>}, {transform_indices = @transform_1, window_bounds = array<i64: 8, 1>}, {transform_indices = @transform_2, window_bounds = array<i64: 8, 1>}, {transform_indices = @transform_3, window_bounds = array<i64: 8, 256>}]} {
    %c0 = arith.constant 0 : index
    %c0_0 = arith.constant 0 : index
    %0 = vector.load %arg1[%c0, %c0_0] : memref<8x256xf32, #tpu.memory_space<vmem>>, vector<8x256xf32>
    %cst = arith.constant dense<0.000000e+00> : vector<8xf32>
    %1 = vector.multi_reduction <add>, %0, %cst [1] : vector<8x256xf32> to vector<8xf32>
    %2 = vector.shape_cast %1 : vector<8xf32> to vector<8x1xf32>
    %3 = arith.mulf %0, %0 : vector<8x256xf32>
    %cst_1 = arith.constant dense<0.000000e+00> : vector<8xf32>
    %4 = vector.multi_reduction <add>, %3, %cst_1 [1] : vector<8x256xf32> to vector<8xf32>
    %5 = vector.shape_cast %4 : vector<8xf32> to vector<8x1xf32>
    %cst_2 = arith.constant 3.906250e-03 : f32
    %6 = vector.broadcast %cst_2 : f32 to vector<8x1xf32>
    %7 = arith.mulf %2, %6 : vector<8x1xf32>
    %cst_3 = arith.constant 3.906250e-03 : f32
    %8 = vector.broadcast %cst_3 : f32 to vector<8x1xf32>
    %9 = arith.mulf %5, %8 : vector<8x1xf32>
    %10 = arith.mulf %7, %7 : vector<8x1xf32>
    %11 = arith.subf %9, %10 : vector<8x1xf32>
    %cst_4 = arith.constant 0.000000e+00 : f32
    %12 = vector.broadcast %cst_4 : f32 to vector<8x1xf32>
    %13 = arith.maximumf %11, %12 : vector<8x1xf32>
    %cst_5 = arith.constant 9.99999974E-6 : f32
    %14 = vector.broadcast %cst_5 : f32 to vector<8x1xf32>
    %15 = arith.addf %13, %14 : vector<8x1xf32>
    %16 = math.rsqrt %15 : vector<8x1xf32>
    %c0_6 = arith.constant 0 : index
    %c0_7 = arith.constant 0 : index
    %17 = vector.load %arg2[%c0_6, %c0_7] : memref<8x1xf32, #tpu.memory_space<vmem>>, vector<8x1xf32>
    %18 = arith.mulf %16, %17 : vector<8x1xf32>
    %c0_8 = arith.constant 0 : index
    %c0_9 = arith.constant 0 : index
    %19 = vector.load %arg3[%c0_8, %c0_9] : memref<8x1xf32, #tpu.memory_space<vmem>>, vector<8x1xf32>
    %20 = arith.mulf %7, %18 : vector<8x1xf32>
    %21 = arith.subf %19, %20 : vector<8x1xf32>
    %22 = vector.broadcast %18 : vector<8x1xf32> to vector<8x256xf32>
    %23 = arith.mulf %0, %22 : vector<8x256xf32>
    %24 = vector.broadcast %21 : vector<8x1xf32> to vector<8x256xf32>
    %25 = arith.addf %23, %24 : vector<8x256xf32>
    %c0_10 = arith.constant 0 : index
    %c0_11 = arith.constant 0 : index
    %26 = vector.load %arg4[%c0_10, %c0_11] : memref<8x256xf32, #tpu.memory_space<vmem>>, vector<8x256xf32>
    tpu.vector_store %arg4[%c0_10, %c0_11], %25 {strides = array<i32>} : memref<8x256xf32, #tpu.memory_space<vmem>>, vector<8x256xf32>,
    return
  }
  func.func @transform_0(%arg0: i32) -> (i32, i32) {
    %c0_i32 = arith.constant 0 : i32
    %c0_i32_0 = arith.constant 0 : i32
    return %arg0, %c0_i32 : i32, i32
  }
  func.func @transform_1(%arg0: i32) -> (i32, i32) {
    %c0_i32 = arith.constant 0 : i32
    %c0_i32_0 = arith.constant 0 : i32
    return %arg0, %c0_i32 : i32, i32
  }
  func.func @transform_2(%arg0: i32) -> (i32, i32) {
    %c0_i32 = arith.constant 0 : i32
    %c0_i32_0 = arith.constant 0 : i32
    return %arg0, %c0_i32 : i32, i32
  }
  func.func @transform_3(%arg0: i32) -> (i32, i32) {
    %c0_i32 = arith.constant 0 : i32
    %c0_i32_0 = arith.constant 0 : i32
    return %arg0, %c0_i32 : i32, i32
  }
}

</mosaic_0001>

<llo_original>
// kernel: tpu_custom_call.1
$region0: #{tpu_custom_call.1}
  #allocation0 [shape = 'u32[]', space=smem, size = 0x4, offset = 0x4, fixed_abs, tag = 'smem constant byte address 0x4 - core index']
  #allocation1 [shape = 'u32[144,128]{1,0:T(1,128)}', space=vmem, size = 0x12000, scoped, tag = 'internal scratch']
  %s0 = inlined_call_operand.vmem [shape: f32[8,256], index: 0, kind: input, shape index: {}]
  %s1 = inlined_call_operand.vmem [shape: f32[8,1], index: 1, kind: input, shape index: {}]
  %s2 = inlined_call_operand.vmem [shape: f32[8,1], index: 2, kind: input, shape index: {}]
  %s3 = inlined_call_operand.hbm [shape: f32[8,256], index: 3, kind: output, shape index: {}]
  %s4 = sld [smem:[#allocation0]]
  $region22: #{tpu_custom_call.1} parent=0
    _
  %s6 = ssub.s32 1, %s4
  %s7 = scalar_select 0, %s6, %s4
  $region1: #{tpu_custom_call.1} parent=0
    #allocation2 [shape = 'u8[8192]{0}', space=vmem, size = 0x2000, scoped, tag = 'output window, operand 0, single buffered']
    #allocation3 [shape = 's32[1]{0}', space=sflag, size = 0x4, scoped, tag = 'scoped memory for tpu_custom_call.1']
    %8 = vsyncpa [#allocation3], 0
    // Predicated region
    $region2: #{tpu_custom_call.1} parent=1 // pred_check
      _
    $region3: #{tpu_custom_call.1} parent=1 // pred_check_branch
      %10 = sbr.rel (0) target = $region5
    $region4: #{tpu_custom_call.1} parent=1 // pred_region
      _
    $region5: #{tpu_custom_call.1} parent=1 // pred_fallthru
      _
    // Predicated region
    $region6: #{tpu_custom_call.1} parent=1 // pred_check
      _
    $region7: #{tpu_custom_call.1} parent=1 // pred_check_branch
      %12 = sbr.rel (0) target = $region9
    $region8: #{tpu_custom_call.1} parent=1 // pred_region
      _
    $region9: #{tpu_custom_call.1} parent=1 // pred_fallthru
      _
    // Predicated region
    $region10: #{tpu_custom_call.1} parent=1 // pred_check
      _
    $region11: #{tpu_custom_call.1} parent=1 // pred_check_branch
      %14 = sbr.rel (0) target = $region13
    $region12: #{tpu_custom_call.1} parent=1 // pred_region
      _
    $region13: #{tpu_custom_call.1} parent=1 // pred_fallthru
      _
    %v15 = vld [vmem:[%s0] sm:$0xff]
    %v16 = vld [vmem:[%s0 + $0x8] sm:$0xff]
    %v17 = vadd.f32 %v15, %v16
    %18 = vadd.xlane.f32.xlu0 %v17
    %v19 = vpop.xlane.xlu0 %18
    %v20 = vmul.f32 %v15, %v15
    %v21 = vmul.f32 %v16, %v16
    %v22 = vadd.f32 %v20, %v21
    %23 = vadd.xlane.f32.xlu0 %v22
    %v24 = vpop.xlane.xlu0 %23
    %v25 = vmul.f32 %v19, 0.00390625
    %v26 = vmul.f32 %v24, 0.00390625
    %v27 = vmul.f32 %v25, %v25
    %v28 = vsub.f32 %v26, %v27
    %v29 = vmax.f32 %v28, 0.0
    %v30 = vadd.f32 %v29, 1e-05
    %v31 = vrsqrt.pop %v30
    %v32 = vld [vmem:[%s1] sm:$0xff]
    %v33 = vmul.f32 %v31, %v32
    %v34 = vld [vmem:[%s2] sm:$0xff]
    %v35 = vmul.f32 %v25, %v33
    %v36 = vsub.f32 %v34, %v35
    %38 = vset.pattern.permute.xlu0 0
    %39 = vperm.xlu0 %38, %v33
    %v40 = vpop.permute.xlu0 %39
    %v42 = vmul.f32 %v15, %v40
    %v43 = vmul.f32 %v16, %v40
    %45 = vset.pattern.permute.xlu0 0
    %46 = vperm.xlu0 %45, %v36
    %v47 = vpop.permute.xlu0 %46
    %v49 = vadd.f32 %v42, %v47
    %v50 = vadd.f32 %v43, %v47
    %51 = vst [vmem:[#allocation2] sm:$0xff] %v49
    %52 = vst [vmem:[#allocation2 + $0x8] sm:$0xff] %v50
    // Predicated region
    $region14: #{tpu_custom_call.1} parent=1 // pred_check
      _
    $region15: #{tpu_custom_call.1} parent=1 // pred_check_branch
      %54 = sbr.rel (0) target = $region17
    $region16: #{tpu_custom_call.1} parent=1 // pred_region
      %s56 = ssub.s32 256, 256
      %57 = vsyncadd [#allocation3], %s56
      %s59 = sshll.u32 [#allocation2], 4
      %s60 = int_to_ptr.vmem [resolvable:$true] %s59
      %62 = dma.vmem_to_hbm [thread:$0]  %s60, 256, %s3, [#allocation3]
    $region17: #{tpu_custom_call.1} parent=1 // pred_fallthru
      _
    // Predicated region
    $region18: #{tpu_custom_call.1} parent=1 // pred_check
      _
    $region19: #{tpu_custom_call.1} parent=1 // pred_check_branch
      %64 = sbr.rel (0) target = $region21
    $region20: #{tpu_custom_call.1} parent=1 // pred_region
      %65 = dma.done [#allocation3], 256
    $region21: #{tpu_custom_call.1} parent=1 // pred_fallthru
      _
    %66 = vsyncpa [#allocation3], 1

</llo_original>
